<compile_context>
chip_gen: v5e
topology: v5e:2x2
jax: 0.10.0
libtpu: 0.0.40
codegen_flags: <defaults>
</compile_context>

<pallas_src>
import numpy as np
import jax
import jax.numpy as jnp
from jax import lax
from jax.experimental import pallas as pl
from jax.experimental.pallas import tpu as pltpu


def make_enhanced_asl_net(input_size, hidden_sizes=(32, 16, 8), n_plds=4, seed=0):
    H = list(hidden_sizes)
    C = H[-1]                    # channels_per_pld
    P = n_plds
    n_shared = len(H) - 1
    n_res = 3
    comb = 2 * C                 # channels_per_pld + hidden_sizes[-1]
    half, quarter = comb // 2, comb // 4

    # ------------- deterministic raw (PyTorch-layout) parameters -------------
    key = jax.random.PRNGKey(seed)

    def nxt():
        nonlocal key
        key, sub = jax.random.split(key)
        return sub

    def linear_params(in_f, out_f):
        bound = 1.0 / (in_f ** 0.5)
        w = jax.random.uniform(nxt(), (out_f, in_f), jnp.float32, -bound, bound)
        b = jax.random.uniform(nxt(), (out_f,), jnp.float32, -bound, bound)
        # pre-transpose to (in, out); bias to (1, out); float64 for exact fusion
        return np.array(w, dtype=np.float64).T, np.array(b, dtype=np.float64)[None, :]

    def bn_params(nf, eps=1e-5):
        gamma = 1.0 + 0.1 * jax.random.normal(nxt(), (nf,), jnp.float32)
        beta = 0.1 * jax.random.normal(nxt(), (nf,), jnp.float32)
        rmean = 0.1 * jax.random.normal(nxt(), (nf,), jnp.float32)
        rvar = 1.0 + 0.1 * jax.random.uniform(nxt(), (nf,), jnp.float32)
        scale = np.array(gamma, np.float64) / np.sqrt(np.array(rvar, np.float64) + eps)
        shift = np.array(beta, np.float64) - np.array(rmean, np.float64) * scale
        return scale[None, :], shift[None, :]

    raw = {}
    raw['in_w'], raw['in_b'] = linear_params(input_size, H[0])
    raw['in_s'], raw['in_sh'] = bn_params(H[0])
    for i in range(n_shared):
        raw[f'sh{i}_w'], raw[f'sh{i}_b'] = linear_params(H[i], H[i + 1])
        raw[f'sh{i}_s'], raw[f'sh{i}_sh'] = bn_params(H[i + 1])
    for r in range(n_res):
        raw[f'res{r}_w1'], raw[f'res{r}_b1'] = linear_params(C, C)
        raw[f'res{r}_s1'], raw[f'res{r}_sh1'] = bn_params(C)
        raw[f'res{r}_w2'], raw[f'res{r}_b2'] = linear_params(C, C)
        raw[f'res{r}_s2'], raw[f'res{r}_sh2'] = bn_params(C)
    raw['da_w'], raw['da_b'] = linear_params(C, C * P)
    raw['a1_w'], raw['a1_b'] = linear_params(C, C)
    raw['a2_w'], raw['a2_b'] = linear_params(C, 1)
    raw['cbf1_w'], raw['cbf1_b'] = linear_params(comb, half)
    raw['cbf2_w'], raw['cbf2_b'] = linear_params(half, quarter)
    raw['att1_w'], raw['att1_b'] = linear_params(comb, half)
    raw['att2_w'], raw['att2_b'] = linear_params(half, quarter)
    raw['cbf_m_w'], raw['cbf_m_b'] = linear_params(quarter, 1)
    raw['cbf_lv_w'], raw['cbf_lv_b'] = linear_params(quarter, 1)
    raw['att_m_w'], raw['att_m_b'] = linear_params(quarter, 1)
    raw['att_lv_w'], raw['att_lv_b'] = linear_params(quarter, 1)

    # ------------- host-side fusion (float64, exact algebra) ------------------
    def fold(w, b, s, sh):          # fold eval-mode BN into preceding Linear
        return w * s, b * s + sh

    fused = {}
    fused['in_w'], fused['in_b'] = fold(raw['in_w'], raw['in_b'], raw['in_s'], raw['in_sh'])
    for i in range(n_shared):
        fused[f'sh{i}_w'], fused[f'sh{i}_b'] = fold(
            raw[f'sh{i}_w'], raw[f'sh{i}_b'], raw[f'sh{i}_s'], raw[f'sh{i}_sh'])
    for r in range(n_res):
        fused[f'res{r}_w1'], fused[f'res{r}_b1'] = fold(
            raw[f'res{r}_w1'], raw[f'res{r}_b1'], raw[f'res{r}_s1'], raw[f'res{r}_sh1'])
        fused[f'res{r}_w2'], fused[f'res{r}_b2'] = fold(
            raw[f'res{r}_w2'], raw[f'res{r}_b2'], raw[f'res{r}_s2'], raw[f'res{r}_sh2'])

    # dim_adjust columns permuted to PLD-major: new col p*C+c <- old col c*P+p
    j = np.arange(C * P)
    perm = (j % C) * P + (j // C)
    w_da = raw['da_w'][:, perm]                       # (C, P*C)
    b_da = raw['da_b'][:, perm]                       # (1, P*C)

    # fuse dim_adjust with attention hidden layer (per-PLD): tanh(x @ Wf + bf)
    w_atth = np.zeros((C, P * C))
    b_atth = np.zeros((1, P * C))
    for p in range(P):
        w_atth[:, p * C:(p + 1) * C] = w_da[:, p * C:(p + 1) * C] @ raw['a1_w']
        b_atth[:, p * C:(p + 1) * C] = b_da[:, p * C:(p + 1) * C] @ raw['a1_w'] + raw['a1_b']
    fused['big_w'] = np.concatenate([w_da, w_atth], axis=1)     # (C, 2*P*C)
    fused['big_b'] = np.concatenate([b_da, b_atth], axis=1)

    # block-diagonal score projection -> (B, P) scores in one matmul
    w_score = np.zeros((P * C, P))
    for p in range(P):
        w_score[p * C:(p + 1) * C, p] = raw['a2_w'][:, 0]
    fused['score_w'] = w_score
    fused['score_b'] = np.full((1, P), raw['a2_b'][0, 0])

    # merged cbf/att branch layer 1, split rows for [attended | x]
    w_br1 = np.concatenate([raw['cbf1_w'], raw['att1_w']], axis=1)   # (2C, 2*half)
    fused['br1_wa'] = w_br1[:C, :]
    fused['br1_wx'] = w_br1[C:, :]
    fused['br1_b'] = np.concatenate([raw['cbf1_b'], raw['att1_b']], axis=1)

    # block-diagonal merged branch layer 2 ...
    w_br2 = np.zeros((2 * half, 2 * quarter))
    w_br2[:half, :quarter] = raw['cbf2_w']
    w_br2[half:, quarter:] = raw['att2_w']
    b_br2 = np.concatenate([raw['cbf2_b'], raw['att2_b']], axis=1)
    # ... and merged uncertainty heads -> cols [cbf_mean, att_mean, cbf_lv, att_lv]
    w_head = np.zeros((2 * quarter, 4))
    w_head[:quarter, 0] = raw['cbf_m_w'][:, 0]
    w_head[quarter:, 1] = raw['att_m_w'][:, 0]
    w_head[:quarter, 2] = raw['cbf_lv_w'][:, 0]
    w_head[quarter:, 3] = raw['att_lv_w'][:, 0]
    b_head = np.concatenate([raw['cbf_m_b'], raw['att_m_b'],
                             raw['cbf_lv_b'], raw['att_lv_b']], axis=1)
    # fold br2 into heads (no nonlinearity between them -> exact)
    fused['tail_w'] = w_br2 @ w_head                  # (2*half, 4)
    fused['tail_b'] = b_br2 @ w_head + b_head         # (1, 4)

    # ------------- pack: ONE bf16 weight slab + ONE tiny f32 bias slab --------
    w_names = (['in_w'] + [f'sh{i}_w' for i in range(n_shared)]
               + [n for r in range(n_res) for n in (f'res{r}_w1', f'res{r}_w2')]
               + ['big_w', 'score_w', 'br1_wa', 'br1_wx', 'tail_w'])
    b_names = (['in_b'] + [f'sh{i}_b' for i in range(n_shared)]
               + [n for r in range(n_res) for n in (f'res{r}_b1', f'res{r}_b2')]
               + ['big_b', 'score_b', 'br1_b', 'tail_b'])

    max_cols = max(int(fused[n].shape[1]) for n in w_names + b_names)
    LANE = ((max_cols + 127) // 128) * 128

    w_off = {}
    cur = 0
    for n in w_names:
        r, c = int(fused[n].shape[0]), int(fused[n].shape[1])
        w_off[n] = (cur, r, c)
        cur += ((r + 15) // 16) * 16          # bf16 sublane-pack alignment
    w_rows = cur
    wbuf_np = np.zeros((w_rows, LANE), np.float32)
    for n in w_names:
        off, r, c = w_off[n]
        wbuf_np[off:off + r, :c] = fused[n]
    wbuf = jnp.asarray(wbuf_np).astype(jnp.bfloat16)

    b_row = {n: (i, int(fused[n].shape[1])) for i, n in enumerate(b_names)}
    b_rows = ((len(b_names) + 7) // 8) * 8
    bbuf_np = np.zeros((b_rows, LANE), np.float32)
    for n in b_names:
        row, c = b_row[n]
        bbuf_np[row, :c] = fused[n][0]
    bbuf = jnp.asarray(bbuf_np)

    # ------------- Pallas kernel: whole forward pass --------------------------
    def make_kernel(tile_b, sub):
        n_sub = tile_b // sub

        def kernel(x_ref, w_ref, b_ref, out_ref):
            def getw(name):
                off, r, c = w_off[name]
                return w_ref[pl.ds(off, r), pl.ds(0, c)]          # bf16 (r, c)

            def getb(name):
                row, c = b_row[name]
                return b_ref[pl.ds(row, 1), pl.ds(0, c)]          # f32 (1, c)

            def lin(v, wn, bn):
                # bf16 operands on the MXU, f32 accumulation, f32 bias add
                return jnp.dot(v.astype(jnp.bfloat16), getw(wn),
                               preferred_element_type=jnp.float32) + getb(bn)

            def compute(x):
                # input + shared layers (BN folded): relu(x @ W' + b')
                x = jnp.maximum(lin(x, 'in_w', 'in_b'), 0.0)
                for i in range(n_shared):
                    x = jnp.maximum(lin(x, f'sh{i}_w', f'sh{i}_b'), 0.0)
                # residual blocks
                for r in range(n_res):
                    h = jnp.maximum(lin(x, f'res{r}_w1', f'res{r}_b1'), 0.0)
                    h = lin(h, f'res{r}_w2', f'res{r}_b2')
                    x = jnp.maximum(x + h, 0.0)

                # fused dim_adjust (PLD-major) + attention hidden pre-activation
                z = lin(x, 'big_w', 'big_b')                 # (sub, 2*P*C)
                xt = z[:, :P * C]                            # x_trans, PLD-major
                h_att = jnp.tanh(z[:, P * C:])
                scores = lin(h_att, 'score_w', 'score_b')    # (sub, P) block-diag

                # softmax over PLDs, normalization factored out (EUP reciprocal)
                m = jnp.max(scores, axis=-1, keepdims=True)
                e = jnp.exp(scores - m)
                inv = pl.reciprocal(jnp.sum(e, axis=-1, keepdims=True), approx=True)
                acc = e[:, 0:1] * xt[:, 0:C]
                for p in range(1, P):
                    acc = acc + e[:, p:p + 1] * xt[:, p * C:(p + 1) * C]
                attended = acc * inv                         # (sub, C)

                # merged cbf/att branch layer 1 (split matmul for [attended|x])
                h = jnp.maximum(
                    jnp.dot(attended.astype(jnp.bfloat16), getw('br1_wa'),
                            preferred_element_type=jnp.float32)
                    + jnp.dot(x.astype(jnp.bfloat16), getw('br1_wx'),
                              preferred_element_type=jnp.float32)
                    + getb('br1_b'), 0.0)
                # branch layer 2 folded into merged heads host-side
                return lin(h, 'tail_w', 'tail_b')            # (sub, 4)

            if n_sub == 1:
                out_ref[...] = compute(x_ref[...])
            else:
                # unrolled sub-chunk loop keeps live (sub, *) temporaries small
                def body(c, carry):
                    r0 = pl.multiple_of(c * sub, sub)
                    out_ref[pl.ds(r0, sub), :] = compute(x_ref[pl.ds(r0, sub), :])
                    return carry
                lax.fori_loop(0, n_sub, body, 0, unroll=True)

        return kernel

    w_spec = pl.BlockSpec((w_rows, LANE), lambda i: (0, 0))   # resident weights
    b_spec = pl.BlockSpec((b_rows, LANE), lambda i: (0, 0))   # resident biases

    # ------------- wrapper -----------------------------------------------------
    def forward(x):
        B = int(x.shape[0])
        if B >= 1024:
            tile_b = 512
        elif B >= 256:
            tile_b = 256
        else:
            tile_b = max(8, ((B + 7) // 8) * 8)
        sub = min(tile_b, 256)
        Bp = ((B + tile_b - 1) // tile_b) * tile_b
        xp = x if Bp == B else jnp.pad(x, ((0, Bp - B), (0, 0)))
        grid = (Bp // tile_b,)
        fn = pl.pallas_call(
            make_kernel(tile_b, sub),
            out_shape=jax.ShapeDtypeStruct((Bp, 4), jnp.float32),
            grid_spec=pltpu.PrefetchScalarGridSpec(
                num_scalar_prefetch=0,
                grid=grid,
                in_specs=[pl.BlockSpec((tile_b, input_size), lambda i: (i, 0)),
                          w_spec, b_spec],
                out_specs=pl.BlockSpec((tile_b, 4), lambda i: (i, 0)),
            ),
            compiler_params=pltpu.CompilerParams(
                dimension_semantics=("parallel",),
                vmem_limit_bytes=32 * 1024 * 1024),
        )
        out = fn(xp, wbuf, bbuf)[:B]
        return out[:, 0:1], out[:, 1:2], out[:, 2:3], out[:, 3:4]

    # ------------- pure numpy (float64) reference, unfused layout -------------
    def reference(x):
        xp = np.asarray(x, np.float64)
        B0 = xp.shape[0]

        def lin(v, w, b):
            return v @ raw[w] + raw[b]

        def bn(v, s, sh):
            return v * raw[s] + raw[sh]

        h = np.maximum(bn(lin(xp, 'in_w', 'in_b'), 'in_s', 'in_sh'), 0.0)
        for i in range(n_shared):
            h = np.maximum(bn(lin(h, f'sh{i}_w', f'sh{i}_b'), f'sh{i}_s', f'sh{i}_sh'), 0.0)
        for r in range(n_res):
            t = np.maximum(bn(lin(h, f'res{r}_w1', f'res{r}_b1'),
                              f'res{r}_s1', f'res{r}_sh1'), 0.0)
            t = bn(lin(t, f'res{r}_w2', f'res{r}_b2'), f'res{r}_s2', f'res{r}_sh2')
            h = np.maximum(h + t, 0.0)
        xa = lin(h, 'da_w', 'da_b')                               # (B, C*P)
        xt = xa.reshape(B0, C, P).transpose(0, 2, 1)              # (B, P, C)
        hh = np.tanh(xt @ raw['a1_w'] + raw['a1_b'])
        sc = (hh @ raw['a2_w'] + raw['a2_b'])[..., 0]             # (B, P)
        sc = sc - sc.max(axis=1, keepdims=True)
        w = np.exp(sc)
        w = w / w.sum(axis=1, keepdims=True)
        attended = (w[:, :, None] * xt).sum(axis=1)               # (B, C)
        xc = np.concatenate([attended, h], axis=1)
        cf = np.maximum(lin(xc, 'cbf1_w', 'cbf1_b'), 0.0)
        cf = lin(cf, 'cbf2_w', 'cbf2_b')
        af = np.maximum(lin(xc, 'att1_w', 'att1_b'), 0.0)
        af = lin(af, 'att2_w', 'att2_b')
        return (lin(cf, 'cbf_m_w', 'cbf_m_b'), lin(af, 'att_m_w', 'att_m_b'),
                lin(cf, 'cbf_lv_w', 'cbf_lv_b'), lin(af, 'att_lv_w', 'att_lv_b'))

    return forward, reference


if __name__ == "__main__":
    # Small deterministic configuration consistent with the module:
    # input_size=32, hidden_sizes=[32,16,8], n_plds=4, batch=8.
    INPUT_SIZE = 32
    HIDDEN_SIZES = (32, 16, 8)
    N_PLDS = 4
    BATCH = 8

    forward, reference = make_enhanced_asl_net(INPUT_SIZE, HIDDEN_SIZES, N_PLDS, seed=0)

    x = jax.random.normal(jax.random.PRNGKey(0), (BATCH, INPUT_SIZE), dtype=jnp.float32)

    outs = forward(x)
    outs = jax.block_until_ready(outs)
    cbf_mean, att_mean, cbf_log_var, att_log_var = outs

    assert cbf_mean.shape == (BATCH, 1)
    assert att_mean.shape == (BATCH, 1)
    assert cbf_log_var.shape == (BATCH, 1)
    assert att_log_var.shape == (BATCH, 1)

    # Validate fused/packed bf16-MXU kernel against the unfused float64 reference.
    for got, want in zip(outs, reference(x)):
        np.testing.assert_allclose(np.asarray(got), want, rtol=2e-2, atol=2e-2)

    print("KERNEL_OK")
</pallas_src>

<mosaic_0001>
module attributes {stable_mosaic.version = 11 : i64} {
  func.func @kernel(%arg0: i32, %arg1: memref<8x32xf32, #tpu.memory_space<vmem>>, %arg2: memref<272x128xbf16, #tpu.memory_space<vmem>>, %arg3: memref<16x128xf32, #tpu.memory_space<vmem>>, %arg4: memref<8x4xf32, #tpu.memory_space<vmem>>) attributes {dimension_semantics = [#tpu.dimension_semantics<parallel>], iteration_bounds = array<i64: 1>, scalar_prefetch = 0 : i64, scratch_operands = 0 : i64, tpu.core_type = #tpu.core_type<tc>, window_params = [{transform_indices = @transform_0, window_bounds = array<i64: 8, 32>}, {pipeline_mode = #tpu.pipeline_mode<synchronous>, transform_indices = @transform_1, window_bounds = array<i64: 272, 128>}, {pipeline_mode = #tpu.pipeline_mode<synchronous>, transform_indices = @transform_2, window_bounds = array<i64: 16, 128>}, {transform_indices = @transform_3, window_bounds = array<i64: 8, 4>}]} {
    %c0 = arith.constant 0 : index
    %c0_0 = arith.constant 0 : index
    %0 = vector.load %arg1[%c0, %c0_0] : memref<8x32xf32, #tpu.memory_space<vmem>>, vector<8x32xf32>
    %1 = arith.truncf %0 : vector<8x32xf32> to vector<8x32xbf16>
    %c0_1 = arith.constant 0 : index
    %c0_2 = arith.constant 0 : index
    %2 = vector.load %arg2[%c0_1, %c0_2] : memref<272x128xbf16, #tpu.memory_space<vmem>>, vector<32x32xbf16>
    %cst = arith.constant dense<0.000000e+00> : vector<8x32xf32>
    %3 = tpu.matmul %1, %2, %cst {dimension_numbers = #tpu.dot_dimension_numbers<[1], [0], [0], [1], [0, 0, 1, 1], [], []>} : vector<8x32xbf16>, vector<32x32xbf16>, vector<8x32xf32> -> vector<8x32xf32>
    %c0_3 = arith.constant 0 : index
    %c0_4 = arith.constant 0 : index
    %4 = vector.load %arg3[%c0_3, %c0_4] : memref<16x128xf32, #tpu.memory_space<vmem>>, vector<1x32xf32>
    %5 = vector.broadcast %4 : vector<1x32xf32> to vector<8x32xf32>
    %6 = arith.addf %3, %5 : vector<8x32xf32>
    %cst_5 = arith.constant 0.000000e+00 : f32
    %7 = vector.broadcast %cst_5 : f32 to vector<8x32xf32>
    %8 = arith.maximumf %6, %7 : vector<8x32xf32>
    %9 = arith.truncf %8 : vector<8x32xf32> to vector<8x32xbf16>
    %c32 = arith.constant 32 : index
    %c0_6 = arith.constant 0 : index
    %10 = vector.load %arg2[%c32, %c0_6] : memref<272x128xbf16, #tpu.memory_space<vmem>>, vector<32x16xbf16>
    %cst_7 = arith.constant dense<0.000000e+00> : vector<8x16xf32>
    %11 = tpu.matmul %9, %10, %cst_7 {dimension_numbers = #tpu.dot_dimension_numbers<[1], [0], [0], [1], [0, 0, 1, 1], [], []>} : vector<8x32xbf16>, vector<32x16xbf16>, vector<8x16xf32> -> vector<8x16xf32>
    %c1 = arith.constant 1 : index
    %c0_8 = arith.constant 0 : index
    %12 = vector.load %arg3[%c1, %c0_8] : memref<16x128xf32, #tpu.memory_space<vmem>>, vector<1x16xf32>
    %13 = vector.broadcast %12 : vector<1x16xf32> to vector<8x16xf32>
    %14 = arith.addf %11, %13 : vector<8x16xf32>
    %cst_9 = arith.constant 0.000000e+00 : f32
    %15 = vector.broadcast %cst_9 : f32 to vector<8x16xf32>
    %16 = arith.maximumf %14, %15 : vector<8x16xf32>
    %17 = arith.truncf %16 : vector<8x16xf32> to vector<8x16xbf16>
    %c64 = arith.constant 64 : index
    %c0_10 = arith.constant 0 : index
    %18 = vector.load %arg2[%c64, %c0_10] : memref<272x128xbf16, #tpu.memory_space<vmem>>, vector<16x8xbf16>
    %cst_11 = arith.constant dense<0.000000e+00> : vector<8x8xf32>
    %19 = tpu.matmul %17, %18, %cst_11 {dimension_numbers = #tpu.dot_dimension_numbers<[1], [0], [0], [1], [0, 0, 1, 1], [], []>} : vector<8x16xbf16>, vector<16x8xbf16>, vector<8x8xf32> -> vector<8x8xf32>
    %c2 = arith.constant 2 : index
    %c0_12 = arith.constant 0 : index
    %20 = vector.load %arg3[%c2, %c0_12] : memref<16x128xf32, #tpu.memory_space<vmem>>, vector<1x8xf32>
    %21 = vector.broadcast %20 : vector<1x8xf32> to vector<8x8xf32>
    %22 = arith.addf %19, %21 : vector<8x8xf32>
    %cst_13 = arith.constant 0.000000e+00 : f32
    %23 = vector.broadcast %cst_13 : f32 to vector<8x8xf32>
    %24 = arith.maximumf %22, %23 : vector<8x8xf32>
    %25 = arith.truncf %24 : vector<8x8xf32> to vector<8x8xbf16>
    %c80 = arith.constant 80 : index
    %c0_14 = arith.constant 0 : index
    %26 = vector.load %arg2[%c80, %c0_14] : memref<272x128xbf16, #tpu.memory_space<vmem>>, vector<8x8xbf16>
    %cst_15 = arith.constant dense<0.000000e+00> : vector<8x8xf32>
    %27 = tpu.matmul %25, %26, %cst_15 {dimension_numbers = #tpu.dot_dimension_numbers<[1], [0], [0], [1], [0, 0, 1, 1], [], []>} : vector<8x8xbf16>, vector<8x8xbf16>, vector<8x8xf32> -> vector<8x8xf32>
    %c3 = arith.constant 3 : index
    %c0_16 = arith.constant 0 : index
    %28 = vector.load %arg3[%c3, %c0_16] : memref<16x128xf32, #tpu.memory_space<vmem>>, vector<1x8xf32>
    %29 = vector.broadcast %28 : vector<1x8xf32> to vector<8x8xf32>
    %30 = arith.addf %27, %29 : vector<8x8xf32>
    %cst_17 = arith.constant 0.000000e+00 : f32
    %31 = vector.broadcast %cst_17 : f32 to vector<8x8xf32>
    %32 = arith.maximumf %30, %31 : vector<8x8xf32>
    %33 = arith.truncf %32 : vector<8x8xf32> to vector<8x8xbf16>
    %c96 = arith.constant 96 : index
    %c0_18 = arith.constant 0 : index
    %34 = vector.load %arg2[%c96, %c0_18] : memref<272x128xbf16, #tpu.memory_space<vmem>>, vector<8x8xbf16>
    %cst_19 = arith.constant dense<0.000000e+00> : vector<8x8xf32>
    %35 = tpu.matmul %33, %34, %cst_19 {dimension_numbers = #tpu.dot_dimension_numbers<[1], [0], [0], [1], [0, 0, 1, 1], [], []>} : vector<8x8xbf16>, vector<8x8xbf16>, vector<8x8xf32> -> vector<8x8xf32>
    %c4 = arith.constant 4 : index
    %c0_20 = arith.constant 0 : index
    %36 = vector.load %arg3[%c4, %c0_20] : memref<16x128xf32, #tpu.memory_space<vmem>>, vector<1x8xf32>
    %37 = vector.broadcast %36 : vector<1x8xf32> to vector<8x8xf32>
    %38 = arith.addf %35, %37 : vector<8x8xf32>
    %39 = arith.addf %24, %38 : vector<8x8xf32>
    %cst_21 = arith.constant 0.000000e+00 : f32
    %40 = vector.broadcast %cst_21 : f32 to vector<8x8xf32>
    %41 = arith.maximumf %39, %40 : vector<8x8xf32>
    %42 = arith.truncf %41 : vector<8x8xf32> to vector<8x8xbf16>
    %c112 = arith.constant 112 : index
    %c0_22 = arith.constant 0 : index
    %43 = vector.load %arg2[%c112, %c0_22] : memref<272x128xbf16, #tpu.memory_space<vmem>>, vector<8x8xbf16>
    %cst_23 = arith.constant dense<0.000000e+00> : vector<8x8xf32>
    %44 = tpu.matmul %42, %43, %cst_23 {dimension_numbers = #tpu.dot_dimension_numbers<[1], [0], [0], [1], [0, 0, 1, 1], [], []>} : vector<8x8xbf16>, vector<8x8xbf16>, vector<8x8xf32> -> vector<8x8xf32>
    %c5 = arith.constant 5 : index
    %c0_24 = arith.constant 0 : index
    %45 = vector.load %arg3[%c5, %c0_24] : memref<16x128xf32, #tpu.memory_space<vmem>>, vector<1x8xf32>
    %46 = vector.broadcast %45 : vector<1x8xf32> to vector<8x8xf32>
    %47 = arith.addf %44, %46 : vector<8x8xf32>
    %cst_25 = arith.constant 0.000000e+00 : f32
    %48 = vector.broadcast %cst_25 : f32 to vector<8x8xf32>
    %49 = arith.maximumf %47, %48 : vector<8x8xf32>
    %50 = arith.truncf %49 : vector<8x8xf32> to vector<8x8xbf16>
    %c128 = arith.constant 128 : index
    %c0_26 = arith.constant 0 : index
    %51 = vector.load %arg2[%c128, %c0_26] : memref<272x128xbf16, #tpu.memory_space<vmem>>, vector<8x8xbf16>
    %cst_27 = arith.constant dense<0.000000e+00> : vector<8x8xf32>
    %52 = tpu.matmul %50, %51, %cst_27 {dimension_numbers = #tpu.dot_dimension_numbers<[1], [0], [0], [1], [0, 0, 1, 1], [], []>} : vector<8x8xbf16>, vector<8x8xbf16>, vector<8x8xf32> -> vector<8x8xf32>
    %c6 = arith.constant 6 : index
    %c0_28 = arith.constant 0 : index
    %53 = vector.load %arg3[%c6, %c0_28] : memref<16x128xf32, #tpu.memory_space<vmem>>, vector<1x8xf32>
    %54 = vector.broadcast %53 : vector<1x8xf32> to vector<8x8xf32>
    %55 = arith.addf %52, %54 : vector<8x8xf32>
    %56 = arith.addf %41, %55 : vector<8x8xf32>
    %cst_29 = arith.constant 0.000000e+00 : f32
    %57 = vector.broadcast %cst_29 : f32 to vector<8x8xf32>
    %58 = arith.maximumf %56, %57 : vector<8x8xf32>
    %59 = arith.truncf %58 : vector<8x8xf32> to vector<8x8xbf16>
    %c144 = arith.constant 144 : index
    %c0_30 = arith.constant 0 : index
    %60 = vector.load %arg2[%c144, %c0_30] : memref<272x128xbf16, #tpu.memory_space<vmem>>, vector<8x8xbf16>
    %cst_31 = arith.constant dense<0.000000e+00> : vector<8x8xf32>
    %61 = tpu.matmul %59, %60, %cst_31 {dimension_numbers = #tpu.dot_dimension_numbers<[1], [0], [0], [1], [0, 0, 1, 1], [], []>} : vector<8x8xbf16>, vector<8x8xbf16>, vector<8x8xf32> -> vector<8x8xf32>
    %c7 = arith.constant 7 : index
    %c0_32 = arith.constant 0 : index
    %62 = vector.load %arg3[%c7, %c0_32] : memref<16x128xf32, #tpu.memory_space<vmem>>, vector<1x8xf32>
    %63 = vector.broadcast %62 : vector<1x8xf32> to vector<8x8xf32>
    %64 = arith.addf %61, %63 : vector<8x8xf32>
    %cst_33 = arith.constant 0.000000e+00 : f32
    %65 = vector.broadcast %cst_33 : f32 to vector<8x8xf32>
    %66 = arith.maximumf %64, %65 : vector<8x8xf32>
    %67 = arith.truncf %66 : vector<8x8xf32> to vector<8x8xbf16>
    %c160 = arith.constant 160 : index
    %c0_34 = arith.constant 0 : index
    %68 = vector.load %arg2[%c160, %c0_34] : memref<272x128xbf16, #tpu.memory_space<vmem>>, vector<8x8xbf16>
    %cst_35 = arith.constant dense<0.000000e+00> : vector<8x8xf32>
    %69 = tpu.matmul %67, %68, %cst_35 {dimension_numbers = #tpu.dot_dimension_numbers<[1], [0], [0], [1], [0, 0, 1, 1], [], []>} : vector<8x8xbf16>, vector<8x8xbf16>, vector<8x8xf32> -> vector<8x8xf32>
    %c8 = arith.constant 8 : index
    %c0_36 = arith.constant 0 : index
    %70 = vector.load %arg3[%c8, %c0_36] : memref<16x128xf32, #tpu.memory_space<vmem>>, vector<1x8xf32>
    %71 = vector.broadcast %70 : vector<1x8xf32> to vector<8x8xf32>
    %72 = arith.addf %69, %71 : vector<8x8xf32>
    %73 = arith.addf %58, %72 : vector<8x8xf32>
    %cst_37 = arith.constant 0.000000e+00 : f32
    %74 = vector.broadcast %cst_37 : f32 to vector<8x8xf32>
    %75 = arith.maximumf %73, %74 : vector<8x8xf32>
    %76 = arith.truncf %75 : vector<8x8xf32> to vector<8x8xbf16>
    %c176 = arith.constant 176 : index
    %c0_38 = arith.constant 0 : index
    %77 = vector.load %arg2[%c176, %c0_38] : memref<272x128xbf16, #tpu.memory_space<vmem>>, vector<8x64xbf16>
    %cst_39 = arith.constant dense<0.000000e+00> : vector<8x64xf32>
    %78 = tpu.matmul %76, %77, %cst_39 {dimension_numbers = #tpu.dot_dimension_numbers<[1], [0], [0], [1], [0, 0, 1, 1], [], []>} : vector<8x8xbf16>, vector<8x64xbf16>, vector<8x64xf32> -> vector<8x64xf32>
    %c9 = arith.constant 9 : index
    %c0_40 = arith.constant 0 : index
    %79 = vector.load %arg3[%c9, %c0_40] : memref<16x128xf32, #tpu.memory_space<vmem>>, vector<1x64xf32>
    %80 = vector.broadcast %79 : vector<1x64xf32> to vector<8x64xf32>
    %81 = arith.addf %78, %80 : vector<8x64xf32>
    %82 = vector.extract_strided_slice %81 {offsets = [0, 0], sizes = [8, 32], strides = [1, 1]} : vector<8x64xf32> to vector<8x32xf32>
    %83 = vector.extract_strided_slice %81 {offsets = [0, 32], sizes = [8, 32], strides = [1, 1]} : vector<8x64xf32> to vector<8x32xf32>
    %84 = math.tanh %83 : vector<8x32xf32>
    %85 = arith.truncf %84 : vector<8x32xf32> to vector<8x32xbf16>
    %c192 = arith.constant 192 : index
    %c0_41 = arith.constant 0 : index
    %86 = vector.load %arg2[%c192, %c0_41] : memref<272x128xbf16, #tpu.memory_space<vmem>>, vector<32x4xbf16>
    %cst_42 = arith.constant dense<0.000000e+00> : vector<8x4xf32>
    %87 = tpu.matmul %85, %86, %cst_42 {dimension_numbers = #tpu.dot_dimension_numbers<[1], [0], [0], [1], [0, 0, 1, 1], [], []>} : vector<8x32xbf16>, vector<32x4xbf16>, vector<8x4xf32> -> vector<8x4xf32>
    %c10 = arith.constant 10 : index
    %c0_43 = arith.constant 0 : index
    %88 = vector.load %arg3[%c10, %c0_43] : memref<16x128xf32, #tpu.memory_space<vmem>>, vector<1x4xf32>
    %89 = vector.broadcast %88 : vector<1x4xf32> to vector<8x4xf32>
    %90 = arith.addf %87, %89 : vector<8x4xf32>
    %cst_44 = arith.constant dense<0xFF800000> : vector<8xf32>
    %91 = vector.multi_reduction <maximumf>, %90, %cst_44 [1] : vector<8x4xf32> to vector<8xf32>
    %92 = vector.shape_cast %91 : vector<8xf32> to vector<8x1xf32>
    %93 = vector.broadcast %92 : vector<8x1xf32> to vector<8x4xf32>
    %94 = arith.subf %90, %93 : vector<8x4xf32>
    %95 = math.exp %94 : vector<8x4xf32>
    %cst_45 = arith.constant dense<0.000000e+00> : vector<8xf32>
    %96 = vector.multi_reduction <add>, %95, %cst_45 [1] : vector<8x4xf32> to vector<8xf32>
    %97 = vector.shape_cast %96 : vector<8xf32> to vector<8x1xf32>
    %98 = tpu.reciprocal %97 {approx = true} : vector<8x1xf32> -> vector<8x1xf32>
    %99 = vector.extract_strided_slice %95 {offsets = [0, 0], sizes = [8, 1], strides = [1, 1]} : vector<8x4xf32> to vector<8x1xf32>
    %100 = vector.extract_strided_slice %82 {offsets = [0, 0], sizes = [8, 8], strides = [1, 1]} : vector<8x32xf32> to vector<8x8xf32>
    %101 = vector.broadcast %99 : vector<8x1xf32> to vector<8x8xf32>
    %102 = arith.mulf %101, %100 : vector<8x8xf32>
    %103 = vector.extract_strided_slice %95 {offsets = [0, 1], sizes = [8, 1], strides = [1, 1]} : vector<8x4xf32> to vector<8x1xf32>
    %104 = vector.extract_strided_slice %82 {offsets = [0, 8], sizes = [8, 8], strides = [1, 1]} : vector<8x32xf32> to vector<8x8xf32>
    %105 = vector.broadcast %103 : vector<8x1xf32> to vector<8x8xf32>
    %106 = arith.mulf %105, %104 : vector<8x8xf32>
    %107 = arith.addf %102, %106 : vector<8x8xf32>
    %108 = vector.extract_strided_slice %95 {offsets = [0, 2], sizes = [8, 1], strides = [1, 1]} : vector<8x4xf32> to vector<8x1xf32>
    %109 = vector.extract_strided_slice %82 {offsets = [0, 16], sizes = [8, 8], strides = [1, 1]} : vector<8x32xf32> to vector<8x8xf32>
    %110 = vector.broadcast %108 : vector<8x1xf32> to vector<8x8xf32>
    %111 = arith.mulf %110, %109 : vector<8x8xf32>
    %112 = arith.addf %107, %111 : vector<8x8xf32>
    %113 = vector.extract_strided_slice %95 {offsets = [0, 3], sizes = [8, 1], strides = [1, 1]} : vector<8x4xf32> to vector<8x1xf32>
    %114 = vector.extract_strided_slice %82 {offsets = [0, 24], sizes = [8, 8], strides = [1, 1]} : vector<8x32xf32> to vector<8x8xf32>
    %115 = vector.broadcast %113 : vector<8x1xf32> to vector<8x8xf32>
    %116 = arith.mulf %115, %114 : vector<8x8xf32>
    %117 = arith.addf %112, %116 : vector<8x8xf32>
    %118 = vector.broadcast %98 : vector<8x1xf32> to vector<8x8xf32>
    %119 = arith.mulf %117, %118 : vector<8x8xf32>
    %120 = arith.truncf %119 : vector<8x8xf32> to vector<8x8xbf16>
    %c224 = arith.constant 224 : index
    %c0_46 = arith.constant 0 : index
    %121 = vector.load %arg2[%c224, %c0_46] : memref<272x128xbf16, #tpu.memory_space<vmem>>, vector<8x16xbf16>
    %cst_47 = arith.constant dense<0.000000e+00> : vector<8x16xf32>
    %122 = tpu.matmul %120, %121, %cst_47 {dimension_numbers = #tpu.dot_dimension_numbers<[1], [0], [0], [1], [0, 0, 1, 1], [], []>} : vector<8x8xbf16>, vector<8x16xbf16>, vector<8x16xf32> -> vector<8x16xf32>
    %123 = arith.truncf %75 : vector<8x8xf32> to vector<8x8xbf16>
    %c240 = arith.constant 240 : index
    %c0_48 = arith.constant 0 : index
    %124 = vector.load %arg2[%c240, %c0_48] : memref<272x128xbf16, #tpu.memory_space<vmem>>, vector<8x16xbf16>
    %cst_49 = arith.constant dense<0.000000e+00> : vector<8x16xf32>
    %125 = tpu.matmul %123, %124, %cst_49 {dimension_numbers = #tpu.dot_dimension_numbers<[1], [0], [0], [1], [0, 0, 1, 1], [], []>} : vector<8x8xbf16>, vector<8x16xbf16>, vector<8x16xf32> -> vector<8x16xf32>
    %126 = arith.addf %122, %125 : vector<8x16xf32>
    %c11 = arith.constant 11 : index
    %c0_50 = arith.constant 0 : index
    %127 = vector.load %arg3[%c11, %c0_50] : memref<16x128xf32, #tpu.memory_space<vmem>>, vector<1x16xf32>
    %128 = vector.broadcast %127 : vector<1x16xf32> to vector<8x16xf32>
    %129 = arith.addf %126, %128 : vector<8x16xf32>
    %cst_51 = arith.constant 0.000000e+00 : f32
    %130 = vector.broadcast %cst_51 : f32 to vector<8x16xf32>
    %131 = arith.maximumf %129, %130 : vector<8x16xf32>
    %132 = arith.truncf %131 : vector<8x16xf32> to vector<8x16xbf16>
    %c256 = arith.constant 256 : index
    %c0_52 = arith.constant 0 : index
    %133 = vector.load %arg2[%c256, %c0_52] : memref<272x128xbf16, #tpu.memory_space<vmem>>, vector<16x4xbf16>
    %cst_53 = arith.constant dense<0.000000e+00> : vector<8x4xf32>
    %134 = tpu.matmul %132, %133, %cst_53 {dimension_numbers = #tpu.dot_dimension_numbers<[1], [0], [0], [1], [0, 0, 1, 1], [], []>} : vector<8x16xbf16>, vector<16x4xbf16>, vector<8x4xf32> -> vector<8x4xf32>
    %c12 = arith.constant 12 : index
    %c0_54 = arith.constant 0 : index
    %135 = vector.load %arg3[%c12, %c0_54] : memref<16x128xf32, #tpu.memory_space<vmem>>, vector<1x4xf32>
    %136 = vector.broadcast %135 : vector<1x4xf32> to vector<8x4xf32>
    %137 = arith.addf %134, %136 : vector<8x4xf32>
    %c0_55 = arith.constant 0 : index
    %c0_56 = arith.constant 0 : index
    %138 = vector.load %arg4[%c0_55, %c0_56] : memref<8x4xf32, #tpu.memory_space<vmem>>, vector<8x4xf32>
    tpu.vector_store %arg4[%c0_55, %c0_56], %137 {strides = array<i32>} : memref<8x4xf32, #tpu.memory_space<vmem>>, vector<8x4xf32>,
    return
  }
  func.func @transform_0(%arg0: i32) -> (i32, i32) {
    %c0_i32 = arith.constant 0 : i32
    %c0_i32_0 = arith.constant 0 : i32
    return %arg0, %c0_i32 : i32, i32
  }
  func.func @transform_1(%arg0: i32) -> (i32, i32) {
    %c0_i32 = arith.constant 0 : i32
    %c0_i32_0 = arith.constant 0 : i32
    %c0_i32_1 = arith.constant 0 : i32
    return %c0_i32, %c0_i32_0 : i32, i32
  }
  func.func @transform_2(%arg0: i32) -> (i32, i32) {
    %c0_i32 = arith.constant 0 : i32
    %c0_i32_0 = arith.constant 0 : i32
    %c0_i32_1 = arith.constant 0 : i32
    return %c0_i32, %c0_i32_0 : i32, i32
  }
  func.func @transform_3(%arg0: i32) -> (i32, i32) {
    %c0_i32 = arith.constant 0 : i32
    %c0_i32_0 = arith.constant 0 : i32
    return %arg0, %c0_i32 : i32, i32
  }
}

</mosaic_0001>

<llo_original>
// kernel: tpu_custom_call.1
$region0: #{tpu_custom_call.1}
  #allocation0 [shape = 'u32[]', space=smem, size = 0x4, offset = 0x4, fixed_abs, tag = 'smem constant byte address 0x4 - core index']
  #allocation1 [shape = 'u32[72,128]{1,0:T(1,128)}', space=vmem, size = 0x9000, scoped, tag = 'internal scratch']
  %s0 = inlined_call_operand.hbm [shape: f32[8,32], index: 0, kind: input, shape index: {}]
  %s1 = inlined_call_operand.hbm [shape: bf16[272,128], index: 1, kind: input, shape index: {}]
  %s2 = inlined_call_operand.hbm [shape: f32[16,128], index: 2, kind: input, shape index: {}]
  %s3 = inlined_call_operand.vmem [shape: f32[8,4], index: 3, kind: output, shape index: {}]
  %s4 = sld [smem:[#allocation0]]
  $region34: #{tpu_custom_call.1} parent=0
    _
  %s6 = ssub.s32 1, %s4
  %s7 = scalar_select 0, %s6, %s4
  $region1: #{tpu_custom_call.1} parent=0
    #allocation2 [shape = 'u8[4096]{0}', space=vmem, size = 0x1000, scoped, tag = 'input window, operand 0, single buffered']
    #allocation3 [shape = 's32[1]{0}', space=sflag, size = 0x4, scoped, tag = 'scoped memory for tpu_custom_call.1']
    #allocation4 [shape = 'u8[69632]{0}', space=vmem, size = 0x11000, scoped, tag = 'input window, operand 1, single buffered']
    #allocation5 [shape = 's32[1]{0}', space=sflag, size = 0x4, scoped, tag = 'scoped memory for tpu_custom_call.1']
    #allocation6 [shape = 'u8[8192]{0}', space=vmem, size = 0x2000, scoped, tag = 'input window, operand 2, single buffered']
    %8 = vsyncpa [#allocation3], 0
    %9 = vsyncpa [#allocation5], 0
    // Predicated region
    $region2: #{tpu_custom_call.1} parent=1 // pred_check
      _
    $region3: #{tpu_custom_call.1} parent=1 // pred_check_branch
      %11 = sbr.rel (0) target = $region5
    $region4: #{tpu_custom_call.1} parent=1 // pred_region
      %13 = vsyncadd [#allocation3], 0
      %s15 = sshll.u32 %s0, 4
      %s16 = int_to_ptr.hbm [resolvable:$true] %s15
      %s17 = sshll.u32 [#allocation2], 4
      %s18 = int_to_ptr.vmem [resolvable:$true] %s17
      %20 = dma.hbm_to_vmem [thread:$0]  %s16, 128, %s18, [#allocation3]
    $region5: #{tpu_custom_call.1} parent=1 // pred_fallthru
      _
    // Predicated region
    $region6: #{tpu_custom_call.1} parent=1 // pred_check
      _
    $region7: #{tpu_custom_call.1} parent=1 // pred_check_branch
      %22 = sbr.rel (0) target = $region9
    $region8: #{tpu_custom_call.1} parent=1 // pred_region
      %24 = vsyncadd [#allocation5], 0
      %s25 = sshll.u32 %s1, 4
      %s26 = int_to_ptr.hbm [resolvable:$true] %s25
      %s27 = sshll.u32 [#allocation4], 4
      %s28 = int_to_ptr.vmem [resolvable:$true] %s27
      %33 = dma.hbm_to_vmem [thread:$0]  %s26, 2176, %s28, [#allocation5], 64, 64, 4
    $region9: #{tpu_custom_call.1} parent=1 // pred_fallthru
      _
    // Predicated region
    $region10: #{tpu_custom_call.1} parent=1 // pred_check
      _
    $region11: #{tpu_custom_call.1} parent=1 // pred_check_branch
      %35 = sbr.rel (0) target = $region13
    $region12: #{tpu_custom_call.1} parent=1 // pred_region
      %37 = vsyncadd [#allocation5], 0
      %s38 = sshll.u32 %s2, 4
      %s39 = int_to_ptr.hbm [resolvable:$true] %s38
      %s40 = sshll.u32 [#allocation6], 4
      %s41 = int_to_ptr.vmem [resolvable:$true] %s40
      %46 = dma.hbm_to_vmem [thread:$0]  %s39, 256, %s41, [#allocation5], 128, 128, 8
    $region13: #{tpu_custom_call.1} parent=1 // pred_fallthru
      _
    // Predicated region
    $region14: #{tpu_custom_call.1} parent=1 // pred_check
      _
    $region15: #{tpu_custom_call.1} parent=1 // pred_check_branch
      %48 = sbr.rel (0) target = $region17
    $region16: #{tpu_custom_call.1} parent=1 // pred_region
      %50 = dma.done [#allocation3], 128
    $region17: #{tpu_custom_call.1} parent=1 // pred_fallthru
      _
    // Predicated region
    $region18: #{tpu_custom_call.1} parent=1 // pred_check
      _
    $region19: #{tpu_custom_call.1} parent=1 // pred_check_branch
      %52 = sbr.rel (0) target = $region21
    $region20: #{tpu_custom_call.1} parent=1 // pred_region
      %54 = dma.done [#allocation5], 2176
    $region21: #{tpu_custom_call.1} parent=1 // pred_fallthru
      _
    // Predicated region
    $region22: #{tpu_custom_call.1} parent=1 // pred_check
      _
    $region23: #{tpu_custom_call.1} parent=1 // pred_check_branch
      %56 = sbr.rel (0) target = $region25
    $region24: #{tpu_custom_call.1} parent=1 // pred_region
      %58 = dma.done [#allocation5], 256
    $region25: #{tpu_custom_call.1} parent=1 // pred_fallthru
      _
    %v60 = vld [vmem:[#allocation2] sm:$0xff]
    %v61 = vpack.c.bf16 %v60, %v60
    %v62 = vld [vmem:[#allocation4] sm:$0xf]
    %v63 = vld [vmem:[#allocation4 + $0x4] sm:$0xf]
    %v64 = vld [vmem:[#allocation4 + $0x8] sm:$0xf]
    %v65 = vld [vmem:[#allocation4 + $0xc] sm:$0xf]
    %v66 = vld [vmem:[#allocation6] sm:$0x1]
    %v67 = vperm.slane %v66, 0
    %v72 = vunpack.c.l.b16 %v62
    %v73 = vunpack.c.l.b16 %v63
    %v74 = vunpack.c.l.b16 %v64
    %v75 = vunpack.c.l.b16 %v65
    %v76 = vpack.c.b16 %v73, %v72
    %v77 = vpack.c.b16 %v75, %v74
    %vm80 = vcmask 261120
    %v82 = vsel %vm80, %v61, 0
    %84 = vmatpush.bf16.msra.mxu0 0
    %85 = vmatpush.bf16.msra.mxu0 0
    %86 = vmatpush.bf16.msra.mxu0 0
    %87 = vmatpush.bf16.msra.mxu0 0
    %88 = vmatpush.bf16.msra.mxu0 0
    %89 = vmatpush.bf16.msra.mxu0 0
    %90 = vmatpush.bf16.msra.mxu0 %v77
    %91 = vmatpush.bf16.msra.mxu0 %v76
    %92 = vmatmul.bf16.gmra.mxu0 %v82
    %v93 = vpop.f32.mrf.mxu0
    %v94 = vadd.f32 %v67, %v93
    %v95 = vpop.f32.mrf.mxu0
    %96 = vdwg.mxu0
    %v97 = vmax.f32 %v94, 0.0
    %v98 = vpack.c.bf16 %v97, %v97
    %v99 = vld [vmem:[#allocation4 + $0x10] sm:$0xf]
    %v100 = vld [vmem:[#allocation4 + $0x14] sm:$0xf]
    %v101 = vld [vmem:[#allocation4 + $0x18] sm:$0xf]
    %v102 = vld [vmem:[#allocation4 + $0x1c] sm:$0xf]
    %v103 = vld [vmem:[#allocation6 + $0x1] sm:$0x1]
    %v104 = vperm.slane %v103, 0
    %v109 = vunpack.c.l.b16 %v99
    %v110 = vunpack.c.l.b16 %v100
    %v111 = vunpack.c.l.b16 %v101
    %v112 = vunpack.c.l.b16 %v102
    %v113 = vpack.c.b16 %v110, %v109
    %v114 = vpack.c.b16 %v112, %v111
    %v118 = vsel %vm80, %v98, 0
    %120 = vmatpush.bf16.msra.mxu0 0
    %121 = vmatpush.bf16.msra.mxu0 0
    %122 = vmatpush.bf16.msra.mxu0 0
    %123 = vmatpush.bf16.msra.mxu0 0
    %124 = vmatpush.bf16.msra.mxu0 0
    %125 = vmatpush.bf16.msra.mxu0 0
    %126 = vmatpush.bf16.msra.mxu0 %v114
    %127 = vmatpush.bf16.msra.mxu0 %v113
    %128 = vmatmul.bf16.gmra.mxu0 %v118
    %v129 = vpop.f32.mrf.mxu0
    %v130 = vadd.f32 %v104, %v129
    %v131 = vpop.f32.mrf.mxu0
    %132 = vdwg.mxu0
    %v133 = vmax.f32 %v130, 0.0
    %v134 = vpack.c.bf16 %v133, %v133
    %v135 = vld [vmem:[#allocation4 + $0x20] sm:$0xf]
    %v136 = vld [vmem:[#allocation4 + $0x24] sm:$0xf]
    %v137 = vld [vmem:[#allocation6 + $0x2] sm:$0x1]
    %v138 = vperm.slane %v137, 0
    %v141 = vunpack.c.l.b16 %v135
    %v142 = vunpack.c.l.b16 %v136
    %v143 = vpack.c.b16 %v142, %v141
    %vm145 = vcmask 130048
    %v147 = vsel %vm145, %v134, 0
    %149 = vmatpush.bf16.msra.mxu0 0
    %150 = vmatpush.bf16.msra.mxu0 0
    %151 = vmatpush.bf16.msra.mxu0 0
    %152 = vmatpush.bf16.msra.mxu0 0
    %153 = vmatpush.bf16.msra.mxu0 0
    %154 = vmatpush.bf16.msra.mxu0 0
    %155 = vmatpush.bf16.msra.mxu0 0
    %156 = vmatpush.bf16.msra.mxu0 %v143
    %157 = vmatmul.bf16.gmra.mxu0 %v147
    %v158 = vpop.f32.mrf.mxu0
    %v159 = vadd.f32 %v138, %v158
    %v160 = vpop.f32.mrf.mxu0
    %161 = vdwg.mxu0
    %v162 = vmax.f32 %v159, 0.0
    %v163 = vpack.c.bf16 %v162, %v162
    %v164 = vld [vmem:[#allocation4 + $0x28] sm:$0xf]
    %v165 = vld [vmem:[#allocation6 + $0x3] sm:$0x1]
    %v166 = vperm.slane %v165, 0
    %vm167 = vcmask 64512
    %v169 = vsel %vm167, %v163, 0
    %vm171 = vcmask 1043456
    %v173 = vsel %vm171, %v164, 0
    %175 = vmatpush.bf16.msra.mxu0 0
    %176 = vmatpush.bf16.msra.mxu0 0
    %177 = vmatpush.bf16.msra.mxu0 0
    %178 = vmatpush.bf16.msra.mxu0 0
    %179 = vmatpush.bf16.msra.mxu0 0
    %180 = vmatpush.bf16.msra.mxu0 0
    %181 = vmatpush.bf16.msra.mxu0 0
    %182 = vmatpush.bf16.msra.mxu0 %v173
    %183 = vmatmul.bf16.gmra.mxu0 %v169
    %v184 = vpop.f32.mrf.mxu0
    %v185 = vadd.f32 %v166, %v184
    %v186 = vpop.f32.mrf.mxu0
    %187 = vdwg.mxu0
    %v188 = vmax.f32 %v185, 0.0
    %v189 = vpack.c.bf16 %v188, %v188
    %v190 = vld [vmem:[#allocation4 + $0x30] sm:$0xf]
    %v191 = vld [vmem:[#allocation6 + $0x4] sm:$0x1]
    %v192 = vperm.slane %v191, 0
    %v194 = vsel %vm167, %v189, 0
    %v197 = vsel %vm171, %v190, 0
    %199 = vmatpush.bf16.msra.mxu0 0
    %200 = vmatpush.bf16.msra.mxu0 0
    %201 = vmatpush.bf16.msra.mxu0 0
    %202 = vmatpush.bf16.msra.mxu0 0
    %203 = vmatpush.bf16.msra.mxu0 0
    %204 = vmatpush.bf16.msra.mxu0 0
    %205 = vmatpush.bf16.msra.mxu0 0
    %206 = vmatpush.bf16.msra.mxu0 %v197
    %207 = vmatmul.bf16.gmra.mxu0 %v194
    %v208 = vpop.f32.mrf.mxu0
    %v209 = vadd.f32 %v192, %v208
    %v210 = vpop.f32.mrf.mxu0
    %211 = vdwg.mxu0
    %v212 = vadd.f32 %v162, %v209
    %v213 = vmax.f32 %v212, 0.0
    %v214 = vpack.c.bf16 %v213, %v213
    %v215 = vld [vmem:[#allocation4 + $0x38] sm:$0xf]
    %v216 = vld [vmem:[#allocation6 + $0x5] sm:$0x1]
    %v217 = vperm.slane %v216, 0
    %v219 = vsel %vm167, %v214, 0
    %v222 = vsel %vm171, %v215, 0
    %224 = vmatpush.bf16.msra.mxu0 0
    %225 = vmatpush.bf16.msra.mxu0 0
    %226 = vmatpush.bf16.msra.mxu0 0
    %227 = vmatpush.bf16.msra.mxu0 0
    %228 = vmatpush.bf16.msra.mxu0 0
    %229 = vmatpush.bf16.msra.mxu0 0
    %230 = vmatpush.bf16.msra.mxu0 0
    %231 = vmatpush.bf16.msra.mxu0 %v222
    %232 = vmatmul.bf16.gmra.mxu0 %v219
    %v233 = vpop.f32.mrf.mxu0
    %v234 = vadd.f32 %v217, %v233
    %v235 = vpop.f32.mrf.mxu0
    %236 = vdwg.mxu0
    %v237 = vmax.f32 %v234, 0.0
    %v238 = vpack.c.bf16 %v237, %v237
    %v239 = vld [vmem:[#allocation4 + $0x40] sm:$0xf]
    %v240 = vld [vmem:[#allocation6 + $0x6] sm:$0x1]
    %v241 = vperm.slane %v240, 0
    %v243 = vsel %vm167, %v238, 0
    %v246 = vsel %vm171, %v239, 0
    %248 = vmatpush.bf16.msra.mxu0 0
    %249 = vmatpush.bf16.msra.mxu0 0
    %250 = vmatpush.bf16.msra.mxu0 0
    %251 = vmatpush.bf16.msra.mxu0 0
    %252 = vmatpush.bf16.msra.mxu0 0
    %253 = vmatpush.bf16.msra.mxu0 0
    %254 = vmatpush.bf16.msra.mxu0 0
    %255 = vmatpush.bf16.msra.mxu0 %v246
    %256 = vmatmul.bf16.gmra.mxu0 %v243
    %v257 = vpop.f32.mrf.mxu0
    %v258 = vadd.f32 %v241, %v257
    %v259 = vpop.f32.mrf.mxu0
    %260 = vdwg.mxu0
    %v261 = vadd.f32 %v213, %v258
    %v262 = vmax.f32 %v261, 0.0
    %v263 = vpack.c.bf16 %v262, %v262
    %v264 = vld [vmem:[#allocation4 + $0x48] sm:$0xf]
    %v265 = vld [vmem:[#allocation6 + $0x7] sm:$0x1]
    %v266 = vperm.slane %v265, 0
    %v268 = vsel %vm167, %v263, 0
    %v271 = vsel %vm171, %v264, 0
    %273 = vmatpush.bf16.msra.mxu0 0
    %274 = vmatpush.bf16.msra.mxu0 0
    %275 = vmatpush.bf16.msra.mxu0 0
    %276 = vmatpush.bf16.msra.mxu0 0
    %277 = vmatpush.bf16.msra.mxu0 0
    %278 = vmatpush.bf16.msra.mxu0 0
    %279 = vmatpush.bf16.msra.mxu0 0
    %280 = vmatpush.bf16.msra.mxu0 %v271
    %281 = vmatmul.bf16.gmra.mxu0 %v268
    %v282 = vpop.f32.mrf.mxu0
    %v283 = vadd.f32 %v266, %v282
    %v284 = vpop.f32.mrf.mxu0
    %285 = vdwg.mxu0
    %v286 = vmax.f32 %v283, 0.0
    %v287 = vpack.c.bf16 %v286, %v286
    %v288 = vld [vmem:[#allocation4 + $0x50] sm:$0xf]
    %v289 = vld [vmem:[#allocation6 + $0x8] sm:$0x1]
    %v290 = vperm.slane %v289, 0
    %v292 = vsel %vm167, %v287, 0
    %v295 = vsel %vm171, %v288, 0
    %297 = vmatpush.bf16.msra.mxu0 0
    %298 = vmatpush.bf16.msra.mxu0 0
    %299 = vmatpush.bf16.msra.mxu0 0
    %300 = vmatpush.bf16.msra.mxu0 0
    %301 = vmatpush.bf16.msra.mxu0 0
    %302 = vmatpush.bf16.msra.mxu0 0
    %303 = vmatpush.bf16.msra.mxu0 0
    %304 = vmatpush.bf16.msra.mxu0 %v295
    %305 = vmatmul.bf16.gmra.mxu0 %v292
    %v306 = vpop.f32.mrf.mxu0
    %v307 = vadd.f32 %v290, %v306
    %v308 = vpop.f32.mrf.mxu0
    %309 = vdwg.mxu0
    %v310 = vadd.f32 %v262, %v307
    %v311 = vmax.f32 %v310, 0.0
    %v312 = vpack.c.bf16 %v311, %v311
    %v313 = vld [vmem:[#allocation4 + $0x58] sm:$0xf]
    %v314 = vld [vmem:[#allocation6 + $0x9] sm:$0x1]
    %v315 = vperm.slane %v314, 0
    %v317 = vsel %vm167, %v312, 0
    %v320 = vsel %vm171, %v313, 0
    %322 = vmatpush.bf16.msra.mxu0 0
    %323 = vmatpush.bf16.msra.mxu0 0
    %324 = vmatpush.bf16.msra.mxu0 0
    %325 = vmatpush.bf16.msra.mxu0 0
    %326 = vmatpush.bf16.msra.mxu0 0
    %327 = vmatpush.bf16.msra.mxu0 0
    %328 = vmatpush.bf16.msra.mxu0 0
    %329 = vmatpush.bf16.msra.mxu0 %v320
    %330 = vmatmul.bf16.gmra.mxu0 %v317
    %v331 = vpop.f32.mrf.mxu0
    %v332 = vadd.f32 %v315, %v331
    %v333 = vpop.f32.mrf.mxu0
    %334 = vdwg.mxu0
    %v335 = vtanh.pop %v332
    %v336 = vpack.c.bf16 %v335, %v335
    %v337 = vld [vmem:[#allocation4 + $0x60] sm:$0xf]
    %v338 = vld [vmem:[#allocation4 + $0x64] sm:$0xf]
    %v339 = vld [vmem:[#allocation4 + $0x68] sm:$0xf]
    %v340 = vld [vmem:[#allocation4 + $0x6c] sm:$0xf]
    %v341 = vld [vmem:[#allocation6 + $0xa] sm:$0x1]
    %v342 = vperm.slane %v341, 0
    %344 = vrot.lane.b32.xlu0 %v336, 96
    %v345 = vpop.permute.xlu0 %344
    %v350 = vunpack.c.l.b16 %v337
    %v351 = vunpack.c.l.b16 %v338
    %v352 = vunpack.c.l.b16 %v339
    %v353 = vunpack.c.l.b16 %v340
    %v354 = vpack.c.b16 %v351, %v350
    %v355 = vpack.c.b16 %v353, %v352
    %v359 = vsel %vm80, %v345, 0
    %361 = vmatpush.bf16.msra.mxu0 0
    %362 = vmatpush.bf16.msra.mxu0 0
    %363 = vmatpush.bf16.msra.mxu0 0
    %364 = vmatpush.bf16.msra.mxu0 0
    %365 = vmatpush.bf16.msra.mxu0 0
    %366 = vmatpush.bf16.msra.mxu0 0
    %367 = vmatpush.bf16.msra.mxu0 %v355
    %368 = vmatpush.bf16.msra.mxu0 %v354
    %369 = vmatmul.bf16.gmra.mxu0 %v359
    %v370 = vpop.f32.mrf.mxu0
    %v371 = vadd.f32 %v342, %v370
    %v372 = vpop.f32.mrf.mxu0
    %373 = vdwg.mxu0
    %vm374 = vcmask 31744
    %v375 = vsel %vm374, %v371, -inf
    %376 = vmax.xlane.f32.xlu0 %v375
    %v377 = vpop.xlane.xlu0 %376
    %v378 = vsub.f32 %v371, %v377
    %v379 = vmul.f32 %v378, 1.442695
    %v380 = vpow.pop %v379
    %v381 = vsel %vm374, %v380, 0.0
    %382 = vadd.xlane.f32.xlu0 %v381
    %v383 = vpop.xlane.xlu0 %382
    %v384 = vrcp.pop %v383
    %386 = vset.pattern.permute.xlu0 0
    %387 = vperm.xlu0 %386, %v380
    %v388 = vpop.permute.xlu0 %387
    %v390 = vmul.f32 %v388, %v332
    %391 = vset.pattern.permute.xlu0 1
    %392 = vperm.xlu0 %391, %v380
    %v393 = vpop.permute.xlu0 %392
    %v395 = vmul.f32 %v393, %v332
    %397 = vrot.lane.b32.xlu0 %v395, 120
    %v398 = vpop.permute.xlu0 %397
    %v400 = vadd.f32 %v390, %v398
    %401 = vset.pattern.permute.xlu0 2
    %402 = vperm.xlu0 %401, %v380
    %v403 = vpop.permute.xlu0 %402
    %v405 = vmul.f32 %v403, %v332
    %407 = vrot.lane.b32.xlu0 %v405, 112
    %v408 = vpop.permute.xlu0 %407
    %v410 = vadd.f32 %v400, %v408
    %411 = vset.pattern.permute.xlu0 3
    %412 = vperm.xlu0 %411, %v380
    %v413 = vpop.permute.xlu0 %412
    %v415 = vmul.f32 %v413, %v332
    %417 = vrot.lane.b32.xlu0 %v415, 104
    %v418 = vpop.permute.xlu0 %417
    %v420 = vadd.f32 %v410, %v418
    %v421 = vmul.f32 %v420, %v384
    %v422 = vpack.c.bf16 %v421, %v421
    %v423 = vld [vmem:[#allocation4 + $0x70] sm:$0xf]
    %v424 = vld [vmem:[#allocation4 + $0x78] sm:$0xf]
    %v426 = vsel %vm171, %v424, 0
    %428 = vmatpush.bf16.msra.mxu0 0
    %429 = vmatpush.bf16.msra.mxu0 0
    %430 = vmatpush.bf16.msra.mxu0 0
    %431 = vmatpush.bf16.msra.mxu0 0
    %432 = vmatpush.bf16.msra.mxu0 0
    %433 = vmatpush.bf16.msra.mxu0 0
    %434 = vmatpush.bf16.msra.mxu0 0
    %435 = vmatpush.bf16.msra.mxu0 %v426
    %436 = vmatmul.bf16.gmra.mxu0 %v317
    %v437 = vpop.f32.mrf.mxu0
    %v438 = vadd.f32 0.0, %v437
    %v439 = vpop.f32.mrf.mxu0
    %440 = vdwg.mxu0
    %v442 = vsel %vm167, %v422, 0
    %v445 = vsel %vm171, %v423, 0
    %447 = vmatpush.bf16.msra.mxu0 0
    %448 = vmatpush.bf16.msra.mxu0 0
    %449 = vmatpush.bf16.msra.mxu0 0
    %450 = vmatpush.bf16.msra.mxu0 0
    %451 = vmatpush.bf16.msra.mxu0 0
    %452 = vmatpush.bf16.msra.mxu0 0
    %453 = vmatpush.bf16.msra.mxu0 0
    %454 = vmatpush.bf16.msra.mxu0 %v445
    %455 = vmatmul.bf16.gmra.mxu0 %v442
    %v456 = vpop.f32.mrf.mxu0
    %v457 = vadd.f32 %v438, %v456
    %v458 = vpop.f32.mrf.mxu0
    %459 = vdwg.mxu0
    %v460 = vld [vmem:[#allocation6 + $0xb] sm:$0x1]
    %v461 = vperm.slane %v460, 0
    %v462 = vadd.f32 %v457, %v461
    %v463 = vmax.f32 %v462, 0.0
    %v464 = vpack.c.bf16 %v463, %v463
    %v465 = vld [vmem:[#allocation4 + $0x80] sm:$0xf]
    %v466 = vld [vmem:[#allocation4 + $0x84] sm:$0xf]
    %v467 = vld [vmem:[#allocation6 + $0xc] sm:$0x1]
    %v468 = vperm.slane %v467, 0
    %v471 = vunpack.c.l.b16 %v465
    %v472 = vunpack.c.l.b16 %v466
    %v473 = vpack.c.b16 %v472, %v471
    %v476 = vsel %vm145, %v464, 0
    %478 = vmatpush.bf16.msra.mxu0 0
    %479 = vmatpush.bf16.msra.mxu0 0
    %480 = vmatpush.bf16.msra.mxu0 0
    %481 = vmatpush.bf16.msra.mxu0 0
    %482 = vmatpush.bf16.msra.mxu0 0
    %483 = vmatpush.bf16.msra.mxu0 0
    %484 = vmatpush.bf16.msra.mxu0 0
    %485 = vmatpush.bf16.msra.mxu0 %v473
    %486 = vmatmul.bf16.gmra.mxu0 %v476
    %v487 = vpop.f32.mrf.mxu0
    %v488 = vadd.f32 %v468, %v487
    %v489 = vpop.f32.mrf.mxu0
    %490 = vdwg.mxu0
    %491 = vst.msk [vmem:[%s3] sm:$0xff] %vm374, %v488
    // Predicated region
    $region26: #{tpu_custom_call.1} parent=1 // pred_check
      _
    $region27: #{tpu_custom_call.1} parent=1 // pred_check_branch
      %493 = sbr.rel (0) target = $region29
    $region28: #{tpu_custom_call.1} parent=1 // pred_region
      _
    $region29: #{tpu_custom_call.1} parent=1 // pred_fallthru
      _
    // Predicated region
    $region30: #{tpu_custom_call.1} parent=1 // pred_check
      _
    $region31: #{tpu_custom_call.1} parent=1 // pred_check_branch
      %495 = sbr.rel (0) target = $region33
    $region32: #{tpu_custom_call.1} parent=1 // pred_region
      _
    $region33: #{tpu_custom_call.1} parent=1 // pred_fallthru
      _
    %496 = vsyncpa [#allocation3], 1
    %497 = vsyncpa [#allocation5], 1

</llo_original>
